<compile_context>
chip_gen: v7x
topology: tpu7x:2x2x1
jax: 0.10.0
libtpu: 0.0.40
codegen_flags: <defaults>
</compile_context>

<pallas_src>
import jax
import jax.numpy as jnp
from jax.experimental import pallas as pl
from jax.experimental.pallas import tpu as pltpu
import numpy as np


# ----------------------------- Pallas kernel --------------------------------
def make_policy_kernel(C, H, W, Hp, Wp, s_size, h_size, a_size):
    RW, CW = 9, 16  # fused pooling window (rows, cols) = (3*3, 4*4)

    def kernel(img_ref, vs_ref, par_ref, out_ref):
        # img_ref: (1, C, H, W)  VMEM  (batch row 0 only, selected by BlockSpec)
        # vs_ref : (1, 2)        SMEM  (row 0 of vs; read as scalars)
        # par_ref: (2*h+3, P)    VMEM  packed [W1 | b1 ; W2h^T ; W2v0 ; W2v1 ; b2]
        # out_ref: (1, a_size)   VMEM

        # ---- pool: MaxPool2d((3,4)) x2 == one (9,16) non-overlapping max ----
        # torch.nan_to_num(pooled) is not assigned in the reference -> no-op.
        chan_rows = []
        for c in range(C):                       # static unroll (tiny C)
            plane = img_ref[0, c].astype(jnp.float32)               # (H, W)
            # Stage A: max over each 16-col chunk (lane reduce) -> (H, Wp)
            chunk_cols = [
                jnp.max(plane[:, CW * j:CW * j + CW], axis=1, keepdims=True)
                for j in range(Wp)
            ]
            t = chunk_cols[0] if Wp == 1 else jnp.concatenate(chunk_cols, axis=1)
            # Stage B: max over each 9-row group (sublane reduce) -> (1, Wp)
            group_rows = [
                jnp.max(t[RW * i:RW * i + RW, :], axis=0, keepdims=True)
                for i in range(Hp)
            ]
            chan_rows.append(group_rows[0] if Hp == 1
                             else jnp.concatenate(group_rows, axis=1))
        # Torch flatten order c*Hp*Wp + i*Wp + j is preserved -> (1, s_size)
        pooled = chan_rows[0] if C == 1 else jnp.concatenate(chan_rows, axis=1)

        # ---- fc: ReLU(p @ W1^T + b1) -- VPU multiply + lane reduce -> (h,1) --
        w1 = par_ref[0:h_size, 0:s_size]                     # (h, s)
        b1 = par_ref[0:h_size, s_size:s_size + 1]            # (h, 1)
        h_col = jnp.maximum(
            jnp.sum(pooled * w1, axis=1, keepdims=True) + b1, 0.0)   # (h, 1)

        # ---- mu: Tanh([h, vs] @ W2^T + b2) -- sublane reduce -> (1, a) -------
        w2h = par_ref[h_size:2 * h_size, 0:a_size]           # (h, a) = W2[:,:h].T
        logits = jnp.sum(h_col * w2h, axis=0, keepdims=True)          # (1, a)
        # One aligned load for the tail: rows [W2[:,h]; W2[:,h+1]; b2]
        tail = par_ref[2 * h_size:2 * h_size + 3, 0:a_size]           # (3, a)
        logits = (logits
                  + vs_ref[0, 0] * tail[0:1, :]
                  + vs_ref[0, 1] * tail[1:2, :]
                  + tail[2:3, :])
        out_ref[...] = jnp.tanh(logits)

    return kernel


# --------------------------- parameter packing -------------------------------
def pack_params(w1, b1, w2, b2, *, s_size, h_size, a_size):
    """Pack torch-layout weights into one f32 slab (done ONCE, outside forward).

    w1: (h_size, s_size), b1: (h_size,), w2: (a_size, h_size+2), b2: (a_size,)
    Slab rows: [0:h)        -> [W1 | b1]      (FC1: contract over lanes)
               [h:2h)       -> W2[:, :h].T    (FC2: contract over sublanes)
               [2h]         -> W2[:, h]       (vs[0] row)
               [2h+1]       -> W2[:, h+1]     (vs[1] row)
               [2h+2]       -> b2
    """
    P = max(s_size + 1, a_size)
    slab = jnp.zeros((2 * h_size + 3, P), jnp.float32)
    slab = slab.at[0:h_size, 0:s_size].set(w1.astype(jnp.float32))
    slab = slab.at[0:h_size, s_size].set(b1.astype(jnp.float32))
    slab = slab.at[h_size:2 * h_size, 0:a_size].set(
        w2[:, :h_size].T.astype(jnp.float32))
    slab = slab.at[2 * h_size, 0:a_size].set(w2[:, h_size].astype(jnp.float32))
    slab = slab.at[2 * h_size + 1, 0:a_size].set(
        w2[:, h_size + 1].astype(jnp.float32))
    slab = slab.at[2 * h_size + 2, 0:a_size].set(b2.astype(jnp.float32))
    return slab


# ------------------------------ wrapper --------------------------------------
def _policy_forward_impl(img, vs, param_slab, h_size, a_size):
    """img: (B, C, H, W) NCHW (native dtype); vs: (B, 2). Returns res[0]."""
    B, C, H, W = img.shape
    Hp, Wp = (H // 3) // 3, (W // 4) // 4
    s_size = C * Hp * Wp
    assert param_slab.shape[0] == 2 * h_size + 3
    assert param_slab.shape[1] >= max(s_size + 1, a_size)

    kernel = make_policy_kernel(C, H, W, Hp, Wp, s_size, h_size, a_size)
    res = pl.pallas_call(
        kernel,
        out_shape=jax.ShapeDtypeStruct((1, a_size), jnp.float32),
        grid=(1,),
        in_specs=[
            # Only batch row 0 is needed -> DMA just that row from HBM.
            # dtype cast happens in-kernel, so no full-batch f32 copy in HBM.
            pl.BlockSpec((1, C, H, W), lambda i: (0, 0, 0, 0)),
            # Only row 0 of vs, staged to SMEM; its two values read as scalars.
            pl.BlockSpec(memory_space=pltpu.MemorySpace.SMEM),
            # One packed parameter slab -> a single VMEM DMA for all weights.
            pl.BlockSpec(memory_space=pltpu.MemorySpace.VMEM),
        ],
        out_specs=pl.BlockSpec((1, a_size), lambda i: (0, 0)),
        # If batching over B later: grid over rows + ("parallel",) to use both
        # TensorCores on v7x; re-derive tile sizes for its 64 MiB VMEM.
        compiler_params=pltpu.CompilerParams(
            dimension_semantics=("arbitrary",)),
    )(img, vs[0:1].astype(jnp.float32), param_slab)
    return res[0]


# Jit the wrapper so the vs row-slice and the trailing res[0] fuse with the
# custom call (no standalone XLA slice dispatch around a ~1 us kernel).
policy_forward = jax.jit(_policy_forward_impl, static_argnums=(3, 4))


# ------------------------- pure-JAX reference --------------------------------
def ref_forward(img, vs, w1, b1, w2, b2):
    B, C, H, W = img.shape
    h1, w1_ = H // 3, W // 4
    x = img[:, :, :3 * h1, :4 * w1_].reshape(B, C, h1, 3, w1_, 4).max(axis=(3, 5))
    h2, w2_ = h1 // 3, w1_ // 4
    x = x[:, :, :3 * h2, :4 * w2_].reshape(B, C, h2, 3, w2_, 4).max(axis=(3, 5))
    flat = x.reshape(B, -1)
    hid = jnp.maximum(flat @ w1.T + b1, 0.0)
    cat = jnp.concatenate([hid, vs], axis=1)
    return jnp.tanh(cat @ w2.T + b2)[0]


# ------------------------------- main -----------------------------------------
if __name__ == "__main__":
    # Small shapes consistent with the module: grayscale image whose size is
    # divisible by the (3,4)+(3,4) pooling, s_size = C*Hp*Wp = 16, h_size = 32.
    B, C, H, W = 2, 1, 36, 64
    h_size, a_size = 32, 2
    Hp, Wp = (H // 3) // 3, (W // 4) // 4
    s_size = C * Hp * Wp                     # 16

    key = jax.random.PRNGKey(0)
    k_img, k_vs, k_w1, k_b1, k_w2, k_b2 = jax.random.split(key, 6)

    img = jax.random.normal(k_img, (B, C, H, W), dtype=jnp.float32)
    vs = jax.random.normal(k_vs, (B, 2), dtype=jnp.float32)

    # torch.nn.Linear native layout: weight (out, in), bias (out,)
    lim1 = 1.0 / np.sqrt(s_size)
    w1 = jax.random.uniform(k_w1, (h_size, s_size), jnp.float32, -lim1, lim1)
    b1 = jax.random.uniform(k_b1, (h_size,), jnp.float32, -lim1, lim1)
    lim2 = 1.0 / np.sqrt(h_size + 2)
    w2 = jax.random.uniform(k_w2, (a_size, h_size + 2), jnp.float32, -lim2, lim2)
    b2 = jax.random.uniform(k_b2, (a_size,), jnp.float32, -lim2, lim2)

    # Pack the five parameter tensors once (outside the forward hot path).
    slab = pack_params(w1, b1, w2, b2,
                       s_size=s_size, h_size=h_size, a_size=a_size)

    out = jax.block_until_ready(policy_forward(img, vs, slab, h_size, a_size))
    ref = jax.block_until_ready(ref_forward(img, vs, w1, b1, w2, b2))

    np.testing.assert_allclose(np.asarray(out), np.asarray(ref),
                               rtol=1e-5, atol=1e-5)
    assert out.shape == (a_size,)
    print("KERNEL_OK")
</pallas_src>

<mosaic_0001>
module attributes {stable_mosaic.version = 11 : i64} {
  func.func @kernel(%arg0: i32, %arg1: memref<1x1x36x64xf32, #tpu.memory_space<vmem>>, %arg2: memref<1x2xf32, #tpu.memory_space<smem>>, %arg3: memref<67x17xf32, #tpu.memory_space<vmem>>, %arg4: memref<1x2xf32, #tpu.memory_space<vmem>>) attributes {dimension_semantics = [#tpu.dimension_semantics<arbitrary>], iteration_bounds = array<i64: 1>, scalar_prefetch = 0 : i64, scratch_operands = 0 : i64, tpu.core_type = #tpu.core_type<tc>, window_params = [{transform_indices = @transform_0, window_bounds = array<i64: 1, 1, 36, 64>}, {transform_indices = @transform_1, window_bounds = array<i64: 1, 2>}, {pipeline_mode = #tpu.pipeline_mode<synchronous>, transform_indices = @transform_2, window_bounds = array<i64: 67, 17>}, {pipeline_mode = #tpu.pipeline_mode<synchronous>, transform_indices = @transform_3, window_bounds = array<i64: 1, 2>}]} {
    %c0 = arith.constant 0 : index
    %c0_0 = arith.constant 0 : index
    %c0_1 = arith.constant 0 : index
    %c0_2 = arith.constant 0 : index
    %0 = vector.load %arg1[%c0, %c0_0, %c0_1, %c0_2] : memref<1x1x36x64xf32, #tpu.memory_space<vmem>>, vector<1x1x36x64xf32>
    %1 = vector.shape_cast %0 : vector<1x1x36x64xf32> to vector<36x64xf32>
    %2 = vector.extract_strided_slice %1 {offsets = [0, 0], sizes = [36, 16], strides = [1, 1]} : vector<36x64xf32> to vector<36x16xf32>
    %cst = arith.constant dense<0xFF800000> : vector<36xf32>
    %3 = vector.multi_reduction <maximumf>, %2, %cst [1] : vector<36x16xf32> to vector<36xf32>
    %4 = vector.shape_cast %3 : vector<36xf32> to vector<36x1xf32>
    %5 = vector.extract_strided_slice %1 {offsets = [0, 16], sizes = [36, 16], strides = [1, 1]} : vector<36x64xf32> to vector<36x16xf32>
    %cst_3 = arith.constant dense<0xFF800000> : vector<36xf32>
    %6 = vector.multi_reduction <maximumf>, %5, %cst_3 [1] : vector<36x16xf32> to vector<36xf32>
    %7 = vector.shape_cast %6 : vector<36xf32> to vector<36x1xf32>
    %8 = vector.extract_strided_slice %1 {offsets = [0, 32], sizes = [36, 16], strides = [1, 1]} : vector<36x64xf32> to vector<36x16xf32>
    %cst_4 = arith.constant dense<0xFF800000> : vector<36xf32>
    %9 = vector.multi_reduction <maximumf>, %8, %cst_4 [1] : vector<36x16xf32> to vector<36xf32>
    %10 = vector.shape_cast %9 : vector<36xf32> to vector<36x1xf32>
    %11 = vector.extract_strided_slice %1 {offsets = [0, 48], sizes = [36, 16], strides = [1, 1]} : vector<36x64xf32> to vector<36x16xf32>
    %cst_5 = arith.constant dense<0xFF800000> : vector<36xf32>
    %12 = vector.multi_reduction <maximumf>, %11, %cst_5 [1] : vector<36x16xf32> to vector<36xf32>
    %13 = vector.shape_cast %12 : vector<36xf32> to vector<36x1xf32>
    %14 = tpu.concatenate %4, %7, %10, %13 in 1 : vector<36x1xf32>, vector<36x1xf32>, vector<36x1xf32>, vector<36x1xf32> -> vector<36x4xf32>
    %15 = vector.extract_strided_slice %14 {offsets = [0, 0], sizes = [9, 4], strides = [1, 1]} : vector<36x4xf32> to vector<9x4xf32>
    %cst_6 = arith.constant dense<0xFF800000> : vector<4xf32>
    %16 = vector.multi_reduction <maximumf>, %15, %cst_6 [0] : vector<9x4xf32> to vector<4xf32>
    %17 = vector.shape_cast %16 : vector<4xf32> to vector<1x4xf32>
    %18 = vector.extract_strided_slice %14 {offsets = [9, 0], sizes = [9, 4], strides = [1, 1]} : vector<36x4xf32> to vector<9x4xf32>
    %cst_7 = arith.constant dense<0xFF800000> : vector<4xf32>
    %19 = vector.multi_reduction <maximumf>, %18, %cst_7 [0] : vector<9x4xf32> to vector<4xf32>
    %20 = vector.shape_cast %19 : vector<4xf32> to vector<1x4xf32>
    %21 = vector.extract_strided_slice %14 {offsets = [18, 0], sizes = [9, 4], strides = [1, 1]} : vector<36x4xf32> to vector<9x4xf32>
    %cst_8 = arith.constant dense<0xFF800000> : vector<4xf32>
    %22 = vector.multi_reduction <maximumf>, %21, %cst_8 [0] : vector<9x4xf32> to vector<4xf32>
    %23 = vector.shape_cast %22 : vector<4xf32> to vector<1x4xf32>
    %24 = vector.extract_strided_slice %14 {offsets = [27, 0], sizes = [9, 4], strides = [1, 1]} : vector<36x4xf32> to vector<9x4xf32>
    %cst_9 = arith.constant dense<0xFF800000> : vector<4xf32>
    %25 = vector.multi_reduction <maximumf>, %24, %cst_9 [0] : vector<9x4xf32> to vector<4xf32>
    %26 = vector.shape_cast %25 : vector<4xf32> to vector<1x4xf32>
    %27 = tpu.concatenate %17, %20, %23, %26 in 1 : vector<1x4xf32>, vector<1x4xf32>, vector<1x4xf32>, vector<1x4xf32> -> vector<1x16xf32>
    %c0_10 = arith.constant 0 : index
    %c0_11 = arith.constant 0 : index
    %28 = vector.load %arg3[%c0_10, %c0_11] : memref<67x17xf32, #tpu.memory_space<vmem>>, vector<32x16xf32>
    %c0_12 = arith.constant 0 : index
    %c16 = arith.constant 16 : index
    %29 = vector.load %arg3[%c0_12, %c16] : memref<67x17xf32, #tpu.memory_space<vmem>>, vector<32x1xf32>
    %30 = vector.broadcast %27 : vector<1x16xf32> to vector<32x16xf32>
    %31 = arith.mulf %30, %28 : vector<32x16xf32>
    %cst_13 = arith.constant dense<0.000000e+00> : vector<32xf32>
    %32 = vector.multi_reduction <add>, %31, %cst_13 [1] : vector<32x16xf32> to vector<32xf32>
    %33 = vector.shape_cast %32 : vector<32xf32> to vector<32x1xf32>
    %34 = arith.addf %33, %29 : vector<32x1xf32>
    %cst_14 = arith.constant 0.000000e+00 : f32
    %35 = vector.broadcast %cst_14 : f32 to vector<32x1xf32>
    %36 = arith.maximumf %34, %35 : vector<32x1xf32>
    %c32 = arith.constant 32 : index
    %c0_15 = arith.constant 0 : index
    %37 = vector.load %arg3[%c32, %c0_15] : memref<67x17xf32, #tpu.memory_space<vmem>>, vector<32x2xf32>
    %38 = vector.broadcast %36 : vector<32x1xf32> to vector<32x2xf32>
    %39 = arith.mulf %38, %37 : vector<32x2xf32>
    %cst_16 = arith.constant dense<0.000000e+00> : vector<2xf32>
    %40 = vector.multi_reduction <add>, %39, %cst_16 [0] : vector<32x2xf32> to vector<2xf32>
    %41 = vector.shape_cast %40 : vector<2xf32> to vector<1x2xf32>
    %c64 = arith.constant 64 : index
    %c0_17 = arith.constant 0 : index
    %42 = vector.load %arg3[%c64, %c0_17] : memref<67x17xf32, #tpu.memory_space<vmem>>, vector<3x2xf32>
    %c0_18 = arith.constant 0 : index
    %c0_19 = arith.constant 0 : index
    %43 = memref.load %arg2[%c0_18, %c0_19] : memref<1x2xf32, #tpu.memory_space<smem>>
    %44 = vector.extract_strided_slice %42 {offsets = [0, 0], sizes = [1, 2], strides = [1, 1]} : vector<3x2xf32> to vector<1x2xf32>
    %45 = vector.broadcast %43 : f32 to vector<1x2xf32>
    %46 = arith.mulf %45, %44 : vector<1x2xf32>
    %47 = arith.addf %41, %46 : vector<1x2xf32>
    %c0_20 = arith.constant 0 : index
    %c1 = arith.constant 1 : index
    %48 = memref.load %arg2[%c0_20, %c1] : memref<1x2xf32, #tpu.memory_space<smem>>
    %49 = vector.extract_strided_slice %42 {offsets = [1, 0], sizes = [1, 2], strides = [1, 1]} : vector<3x2xf32> to vector<1x2xf32>
    %50 = vector.broadcast %48 : f32 to vector<1x2xf32>
    %51 = arith.mulf %50, %49 : vector<1x2xf32>
    %52 = arith.addf %47, %51 : vector<1x2xf32>
    %53 = vector.extract_strided_slice %42 {offsets = [2, 0], sizes = [1, 2], strides = [1, 1]} : vector<3x2xf32> to vector<1x2xf32>
    %54 = arith.addf %52, %53 : vector<1x2xf32>
    %55 = math.tanh %54 : vector<1x2xf32>
    %c0_21 = arith.constant 0 : index
    %c0_22 = arith.constant 0 : index
    %56 = vector.load %arg4[%c0_21, %c0_22] : memref<1x2xf32, #tpu.memory_space<vmem>>, vector<1x2xf32>
    tpu.vector_store %arg4[%c0_21, %c0_22], %55 {strides = array<i32>} : memref<1x2xf32, #tpu.memory_space<vmem>>, vector<1x2xf32>,
    return
  }
  func.func @transform_0(%arg0: i32) -> (i32, i32, i32, i32) {
    %c0_i32 = arith.constant 0 : i32
    %c0_i32_0 = arith.constant 0 : i32
    %c0_i32_1 = arith.constant 0 : i32
    %c0_i32_2 = arith.constant 0 : i32
    %c0_i32_3 = arith.constant 0 : i32
    return %c0_i32, %c0_i32_0, %c0_i32_1, %c0_i32_2 : i32, i32, i32, i32
  }
  func.func @transform_1(%arg0: i32) -> (i32, i32) {
    %c0_i32 = arith.constant 0 : i32
    %c0_i32_0 = arith.constant 0 : i32
    %c0_i32_1 = arith.constant 0 : i32
    return %c0_i32, %c0_i32_0 : i32, i32
  }
  func.func @transform_2(%arg0: i32) -> (i32, i32) {
    %c0_i32 = arith.constant 0 : i32
    %c0_i32_0 = arith.constant 0 : i32
    %c0_i32_1 = arith.constant 0 : i32
    return %c0_i32, %c0_i32_0 : i32, i32
  }
  func.func @transform_3(%arg0: i32) -> (i32, i32) {
    %c0_i32 = arith.constant 0 : i32
    %c0_i32_0 = arith.constant 0 : i32
    %c0_i32_1 = arith.constant 0 : i32
    return %c0_i32, %c0_i32_0 : i32, i32
  }
}

</mosaic_0001>

<llo_original>
// kernel: _policy_forward_impl.1
$region0: #{_policy_forward_impl.1}
  #allocation0 [shape = 'u32[]', space=smem, size = 0x4, offset = 0x4, fixed_abs, tag = 'smem constant byte address 0x4 - core index']
  #allocation1 [shape = 'u32[144,128]{1,0:T(1,128)}', space=vmem, size = 0x12000, scoped, tag = 'internal scratch']
  %s0 = inlined_call_operand.vmem [shape: f32[2,1,36,64], index: 0, kind: input, shape index: {}]
  %s1 = inlined_call_operand.vmem [shape: f32[1,2], index: 1, kind: input, shape index: {}]
  %s2 = inlined_call_operand.vmem [shape: f32[67,17], index: 2, kind: input, shape index: {}]
  %s3 = inlined_call_operand.hbm [shape: f32[1,2], index: 3, kind: output, shape index: {}]
  %s4 = sld [smem:[#allocation0]]
  $region26: #{_policy_forward_impl.1} parent=0
    _
  %s6 = ssub.s32 1, %s4
  %s7 = scalar_select 0, %s6, %s4
  $region1: #{_policy_forward_impl.1} parent=0
    #allocation2 [shape = 'u8[512]{0}', space=smem, size = 0x200, scoped, tag = 'input window, operand 1, single buffered']
    #allocation3 [shape = 's32[1]{0}', space=sflag, size = 0x4, scoped, tag = 'scoped memory for _policy_forward_impl.1']
    #allocation4 [shape = 's32[1]{0}', space=sflag, size = 0x4, scoped, tag = 'scoped memory for _policy_forward_impl.1']
    #allocation5 [shape = 'u8[512]{0}', space=vmem, size = 0x400, scoped, tag = 'output window, operand 0, single buffered']
    %8 = vsyncpa [#allocation4], 0
    %9 = vsyncpa [#allocation3], 0
    // Predicated region
    $region2: #{_policy_forward_impl.1} parent=1 // pred_check
      _
    $region3: #{_policy_forward_impl.1} parent=1 // pred_check_branch
      %11 = sbr.rel (0) target = $region5
    $region4: #{_policy_forward_impl.1} parent=1 // pred_region
      _
    $region5: #{_policy_forward_impl.1} parent=1 // pred_fallthru
      _
    // Predicated region
    $region6: #{_policy_forward_impl.1} parent=1 // pred_check
      _
    $region7: #{_policy_forward_impl.1} parent=1 // pred_check_branch
      %13 = sbr.rel (0) target = $region9
    $region8: #{_policy_forward_impl.1} parent=1 // pred_region
      %s15 = ssub.s32 16, 16
      %16 = vsyncadd [#allocation4], %s15
      %s18 = sshll.u32 %s1, 4
      %s19 = int_to_ptr.vmem [resolvable:$true] %s18
      %21 = dma.vmem_to_smem %s19, 16, [#allocation2], [#allocation4]
    $region9: #{_policy_forward_impl.1} parent=1 // pred_fallthru
      _
    // Predicated region
    $region10: #{_policy_forward_impl.1} parent=1 // pred_check
      _
    $region11: #{_policy_forward_impl.1} parent=1 // pred_check_branch
      %23 = sbr.rel (0) target = $region13
    $region12: #{_policy_forward_impl.1} parent=1 // pred_region
      _
    $region13: #{_policy_forward_impl.1} parent=1 // pred_fallthru
      _
    // Predicated region
    $region14: #{_policy_forward_impl.1} parent=1 // pred_check
      _
    $region15: #{_policy_forward_impl.1} parent=1 // pred_check_branch
      %25 = sbr.rel (0) target = $region17
    $region16: #{_policy_forward_impl.1} parent=1 // pred_region
      %26 = dma.done [#allocation4], 16
    $region17: #{_policy_forward_impl.1} parent=1 // pred_fallthru
      _
    %27 = sfence
    %v28 = vld [vmem:[%s0] sm:$0xff]
    %v29 = vld [vmem:[%s0 + $0x8] sm:$0xff]
    %v30 = vld [vmem:[%s0 + $0x10] sm:$0xff]
    %v31 = vld [vmem:[%s0 + $0x18] sm:$0xff]
    %v32 = vld [vmem:[%s0 + $0x20] sm:$0xf]
    %vm33 = vcmask 130048
    %v34 = vsel %vm33, %v28, -inf
    %35 = vmax.xlane.f32.xlu0 %v34
    %v36 = vpop.xlane.xlu0 %35
    %v37 = vsel %vm33, %v29, -inf
    %38 = vmax.xlane.f32.xlu0 %v37
    %v39 = vpop.xlane.xlu0 %38
    %v40 = vsel %vm33, %v30, -inf
    %41 = vmax.xlane.f32.xlu0 %v40
    %v42 = vpop.xlane.xlu0 %41
    %v43 = vsel %vm33, %v31, -inf
    %44 = vmax.xlane.f32.xlu0 %v43
    %v45 = vpop.xlane.xlu0 %44
    %vm46 = vcmask 125952
    %v47 = vsel %vm46, %v32, -inf
    %48 = vmax.xlane.f32.xlu0 %v47
    %v49 = vpop.xlane.xlu0 %48
    %vm50 = vcmask 261248
    %v51 = vsel %vm50, %v28, -inf
    %52 = vmax.xlane.f32.xlu0 %v51
    %v53 = vpop.xlane.xlu0 %52
    %v54 = vsel %vm50, %v29, -inf
    %55 = vmax.xlane.f32.xlu0 %v54
    %v56 = vpop.xlane.xlu0 %55
    %v57 = vsel %vm50, %v30, -inf
    %58 = vmax.xlane.f32.xlu0 %v57
    %v59 = vpop.xlane.xlu0 %58
    %v60 = vsel %vm50, %v31, -inf
    %61 = vmax.xlane.f32.xlu0 %v60
    %v62 = vpop.xlane.xlu0 %61
    %vm63 = vcmask 257152
    %v64 = vsel %vm63, %v32, -inf
    %65 = vmax.xlane.f32.xlu0 %v64
    %v66 = vpop.xlane.xlu0 %65
    %vm67 = vcmask 392448
    %v68 = vsel %vm67, %v28, -inf
    %69 = vmax.xlane.f32.xlu0 %v68
    %v70 = vpop.xlane.xlu0 %69
    %v71 = vsel %vm67, %v29, -inf
    %72 = vmax.xlane.f32.xlu0 %v71
    %v73 = vpop.xlane.xlu0 %72
    %v74 = vsel %vm67, %v30, -inf
    %75 = vmax.xlane.f32.xlu0 %v74
    %v76 = vpop.xlane.xlu0 %75
    %v77 = vsel %vm67, %v31, -inf
    %78 = vmax.xlane.f32.xlu0 %v77
    %v79 = vpop.xlane.xlu0 %78
    %vm80 = vcmask 388352
    %v81 = vsel %vm80, %v32, -inf
    %82 = vmax.xlane.f32.xlu0 %v81
    %v83 = vpop.xlane.xlu0 %82
    %vm84 = vcmask 523648
    %v85 = vsel %vm84, %v28, -inf
    %86 = vmax.xlane.f32.xlu0 %v85
    %v87 = vpop.xlane.xlu0 %86
    %v88 = vsel %vm84, %v29, -inf
    %89 = vmax.xlane.f32.xlu0 %v88
    %v90 = vpop.xlane.xlu0 %89
    %v91 = vsel %vm84, %v30, -inf
    %92 = vmax.xlane.f32.xlu0 %v91
    %v93 = vpop.xlane.xlu0 %92
    %v94 = vsel %vm84, %v31, -inf
    %95 = vmax.xlane.f32.xlu0 %v94
    %v96 = vpop.xlane.xlu0 %95
    %vm97 = vcmask 519552
    %v98 = vsel %vm97, %v32, -inf
    %99 = vmax.xlane.f32.xlu0 %v98
    %v100 = vpop.xlane.xlu0 %99
    %vm101 = vcmask 7168
    %v102 = vsel %vm101, %v36, %v53
    %v103 = vsel %vm101, %v39, %v56
    %v104 = vsel %vm101, %v42, %v59
    %v105 = vsel %vm101, %v45, %v62
    %v106 = vsel %vm101, %v49, %v66
    %vm107 = vcmask 15360
    %v108 = vsel %vm107, %v102, %v70
    %v109 = vsel %vm107, %v103, %v73
    %v110 = vsel %vm107, %v104, %v76
    %v111 = vsel %vm107, %v105, %v79
    %v112 = vsel %vm107, %v106, %v83
    %vm113 = vcmask 23552
    %v114 = vsel %vm113, %v108, %v87
    %v115 = vsel %vm113, %v109, %v90
    %v116 = vsel %vm113, %v110, %v93
    %v117 = vsel %vm113, %v111, %v96
    %v118 = vsel %vm113, %v112, %v100
    %vm119 = vcmask 31744
    %v120 = vsel %vm119, %v114, -inf
    %vm121 = vcmask 24576
    %v122 = vsel %vm121, %v115, -inf
    %v123 = vmax.f32 %v120, %v122
    %v124 = vrot.slane %v123, 4
    %v125 = vmax.f32 %v123, %v124
    %v126 = vrot.slane %v125, 2
    %v127 = vmax.f32 %v125, %v126
    %v128 = vrot.slane %v127, 1
    %v129 = vmax.f32 %v127, %v128
    %vm130 = vcmask 31745
    %v131 = vsel %vm130, %v115, -inf
    %vm132 = vcmask 25600
    %v133 = vsel %vm132, %v116, -inf
    %v134 = vmax.f32 %v131, %v133
    %v135 = vrot.slane %v134, 4
    %v136 = vmax.f32 %v134, %v135
    %v137 = vrot.slane %v136, 2
    %v138 = vmax.f32 %v136, %v137
    %v139 = vrot.slane %v138, 1
    %v140 = vmax.f32 %v138, %v139
    %vm141 = vcmask 31746
    %v142 = vsel %vm141, %v116, -inf
    %vm143 = vcmask 26624
    %v144 = vsel %vm143, %v117, -inf
    %v145 = vmax.f32 %v142, %v144
    %v146 = vrot.slane %v145, 4
    %v147 = vmax.f32 %v145, %v146
    %v148 = vrot.slane %v147, 2
    %v149 = vmax.f32 %v147, %v148
    %v150 = vrot.slane %v149, 1
    %v151 = vmax.f32 %v149, %v150
    %vm152 = vcmask 31747
    %v153 = vsel %vm152, %v117, -inf
    %vm154 = vcmask 27648
    %v155 = vsel %vm154, %v118, -inf
    %v156 = vmax.f32 %v153, %v155
    %v157 = vrot.slane %v156, 4
    %v158 = vmax.f32 %v156, %v157
    %v159 = vrot.slane %v158, 2
    %v160 = vmax.f32 %v158, %v159
    %v161 = vrot.slane %v160, 1
    %v162 = vmax.f32 %v160, %v161
    %164 = vrot.lane.b32.xlu0 %v140, 4
    %v165 = vpop.permute.xlu0 %164
    %168 = vrot.lane.b32.xlu0 %v151, 8
    %v169 = vpop.permute.xlu0 %168
    %172 = vrot.lane.b32.xlu0 %v162, 12
    %v173 = vpop.permute.xlu0 %172
    %v175 = vsel %vm119, %v129, %v165
    %vm176 = vcmask 64512
    %v177 = vsel %vm176, %v175, %v169
    %vm178 = vcmask 97280
    %v179 = vsel %vm178, %v177, %v173
    %v180 = vld [vmem:[%s2] sm:$0xff]
    %v181 = vld [vmem:[%s2 + $0x8] sm:$0xff]
    %v182 = vld [vmem:[%s2 + $0x10] sm:$0xff]
    %v183 = vld [vmem:[%s2 + $0x18] sm:$0xff]
    %v184 = vlaneseq
    %v185 = vshrl.u32 %v184, 7
    %v186 = vsub.s32 0, %v185
    %v187 = vrot.slane %v179, %v186
    %v188 = vmul.f32 %v187, %v180
    %v189 = vmul.f32 %v187, %v181
    %v190 = vmul.f32 %v187, %v182
    %v191 = vmul.f32 %v187, %v183
    %v192 = vsel %vm33, %v188, 0.0
    %193 = vadd.xlane.f32.xlu0 %v192
    %v194 = vpop.xlane.xlu0 %193
    %v195 = vsel %vm33, %v189, 0.0
    %196 = vadd.xlane.f32.xlu0 %v195
    %v197 = vpop.xlane.xlu0 %196
    %v198 = vsel %vm33, %v190, 0.0
    %199 = vadd.xlane.f32.xlu0 %v198
    %v200 = vpop.xlane.xlu0 %199
    %v201 = vsel %vm33, %v191, 0.0
    %202 = vadd.xlane.f32.xlu0 %v201
    %v203 = vpop.xlane.xlu0 %202
    %v204 = vadd.f32 %v194, %v180
    %v205 = vadd.f32 %v197, %v181
    %v206 = vadd.f32 %v200, %v182
    %v207 = vadd.f32 %v203, %v183
    %v208 = vmax.f32 %v204, 0.0
    %v209 = vmax.f32 %v205, 0.0
    %v210 = vmax.f32 %v206, 0.0
    %v211 = vmax.f32 %v207, 0.0
    %v212 = vld [vmem:[%s2 + $0x20] sm:$0xff]
    %v213 = vld [vmem:[%s2 + $0x28] sm:$0xff]
    %v214 = vld [vmem:[%s2 + $0x30] sm:$0xff]
    %v215 = vld [vmem:[%s2 + $0x38] sm:$0xff]
    %217 = vset.pattern.permute.xlu0 16
    %218 = vperm.xlu0 %217, %v208
    %v219 = vpop.permute.xlu0 %218
    %222 = vset.pattern.permute.xlu0 16
    %223 = vperm.xlu0 %222, %v209
    %v224 = vpop.permute.xlu0 %223
    %227 = vset.pattern.permute.xlu0 16
    %228 = vperm.xlu0 %227, %v210
    %v229 = vpop.permute.xlu0 %228
    %232 = vset.pattern.permute.xlu0 16
    %233 = vperm.xlu0 %232, %v211
    %v234 = vpop.permute.xlu0 %233
    %v236 = vmul.f32 %v219, %v212
    %v237 = vmul.f32 %v224, %v213
    %v238 = vmul.f32 %v229, %v214
    %v239 = vmul.f32 %v234, %v215
    %v240 = vsel %vm107, %v236, 0.0
    %v241 = vsel %vm107, %v237, 0.0
    %v242 = vadd.f32 %v240, %v241
    %v243 = vsel %vm107, %v238, 0.0
    %v244 = vadd.f32 %v242, %v243
    %v245 = vsel %vm107, %v239, 0.0
    %v246 = vadd.f32 %v244, %v245
    %v247 = vrot.slane %v246, 4
    %v248 = vadd.f32 %v246, %v247
    %v249 = vrot.slane %v248, 2
    %v250 = vadd.f32 %v248, %v249
    %v251 = vrot.slane %v250, 1
    %v252 = vadd.f32 %v250, %v251
    %v253 = vld [vmem:[%s2 + $0x40] sm:$0x7]
    %s254 = sld [smem:[#allocation2]]
    %v255 = vstv %s254
    %v256 = vmul.f32 %v255, %v253
    %v257 = vadd.f32 %v252, %v256
    %s258 = sld [smem:[#allocation2 + $0x1]]
    %v259 = vstv %s258
    %v260 = vmul.f32 %v259, %v253
    %v262 = vrot.slane %v260, 1
    %v264 = vadd.f32 %v257, %v262
    %v266 = vrot.slane %v253, 2
    %v268 = vadd.f32 %v264, %v266
    %v269 = vtanh.pop %v268
    %vm270 = vcmask 8192
    %271 = vst.msk [vmem:[#allocation5] sm:$0x1] %vm270, %v269
    // Predicated region
    $region18: #{_policy_forward_impl.1} parent=1 // pred_check
      _
    $region19: #{_policy_forward_impl.1} parent=1 // pred_check_branch
      %273 = sbr.rel (0) target = $region21
    $region20: #{_policy_forward_impl.1} parent=1 // pred_region
      %s275 = ssub.s32 16, 16
      %276 = vsyncadd [#allocation3], %s275
      %s278 = sshll.u32 [#allocation5], 4
      %s279 = int_to_ptr.vmem [resolvable:$true] %s278
      %281 = dma.vmem_to_hbm [thread:$0]  %s279, 16, %s3, [#allocation3]
    $region21: #{_policy_forward_impl.1} parent=1 // pred_fallthru
      _
    // Predicated region
    $region22: #{_policy_forward_impl.1} parent=1 // pred_check
      _
    $region23: #{_policy_forward_impl.1} parent=1 // pred_check_branch
      %283 = sbr.rel (0) target = $region25
    $region24: #{_policy_forward_impl.1} parent=1 // pred_region
      %284 = dma.done [#allocation3], 16
    $region25: #{_policy_forward_impl.1} parent=1 // pred_fallthru
      _
    %285 = vsyncpa [#allocation3], 1
    %286 = vsyncpa [#allocation4], 1

</llo_original>
